<compile_context>
chip_gen: v7x
topology: tpu7x:2x2x1
jax: 0.10.0
libtpu: 0.0.40
codegen_flags: <defaults>
</compile_context>

<pallas_src>
import functools

import jax
import jax.numpy as jnp
from jax import lax
from jax.experimental import pallas as pl
from jax.experimental.pallas import tpu as pltpu


def _round_up(x, m):
    return ((x + m - 1) // m) * m


def _pick_tile(n, row_bytes, cap=256, budget_bytes=24 * 1024 * 1024):
    """Rows per grid step.

    - n <= 8: take the whole dim (block == array dim, always legal, no ragged
      block).
    - otherwise: a multiple of 8, sized so (a) the grid has >= ~4 steps (keeps
      both v7x TensorCores busy), (b) the double-buffered input footprint fits
      the VMEM budget, (c) never above `cap`.
    """
    if n <= 8:
        return n
    by_budget = max(8, ((budget_bytes // max(row_bytes, 1)) // 2) // 8 * 8)
    by_cores = _round_up(pl.cdiv(n, 4), 8)
    return max(8, min(cap, by_budget, by_cores))


# ---------------------------------------------------------------------------
# Pallas kernel 1: encoder projection
#   y = tanh(pooled @ W + b); if normalize: y /= max(||y||, eps)
# ---------------------------------------------------------------------------
def _proj_kernel(x_ref, w_ref, b_ref, o_ref, *, normalize: bool):
    # x: (TN, H) bf16, w: (H, D) bf16, b: (1, D) f32, o: (TN, D) bf16
    acc = jnp.dot(x_ref[...], w_ref[...], preferred_element_type=jnp.float32)
    y = jnp.tanh(acc + b_ref[...])                               # (TN, D) f32
    if normalize:
        eps = jnp.float32(1e-8)
        # 1 / max(||y||, eps) == rsqrt(max(||y||^2, eps^2))  (EUP slot)
        inv = lax.rsqrt(jnp.maximum(jnp.sum(y * y, axis=-1, keepdims=True),
                                    eps * eps))
        y = y * inv
    o_ref[...] = y.astype(o_ref.dtype)


def encoder_project(pooled, w, b, *, normalize, out_dtype=jnp.bfloat16,
                    tile_n=None):
    """pooled: [N, H] bf16, w: [H, D] bf16, b: [1, D] f32 -> [N, D] out_dtype."""
    n, h = pooled.shape
    d = w.shape[1]
    itemsize = jnp.dtype(pooled.dtype).itemsize
    tn = tile_n if tile_n is not None else _pick_tile(n, (h + d) * itemsize)

    kernel = functools.partial(_proj_kernel, normalize=normalize)
    return pl.pallas_call(
        kernel,
        out_shape=jax.ShapeDtypeStruct((n, d), out_dtype),
        grid_spec=pltpu.PrefetchScalarGridSpec(
            num_scalar_prefetch=0,
            grid=(pl.cdiv(n, tn),),
            in_specs=[
                pl.BlockSpec((tn, h), lambda i: (i, 0)),   # pooled rows tile
                pl.BlockSpec((h, d), lambda i: (0, 0)),    # weight, VMEM-resident
                pl.BlockSpec((1, d), lambda i: (0, 0)),    # bias, VMEM-resident
            ],
            out_specs=pl.BlockSpec((tn, d), lambda i: (i, 0)),
        ),
        compiler_params=pltpu.CompilerParams(
            dimension_semantics=("parallel",),
            vmem_limit_bytes=32 * 1024 * 1024,
        ),
    )(pooled, w, b)


# ---------------------------------------------------------------------------
# Pallas kernel 2: batched dot score (the CLOnEL.forward hot path)
#   cosine mode: embeddings are L2-normalized at encode time, so dot == cosine
#   dot mode:    plain batched dot (torch.bmm(q.unsqueeze(1), c^T).squeeze(1))
# ---------------------------------------------------------------------------
def _dot_sim_kernel(q_ref, c_ref, o_ref, *, d_chunk=256):
    # q: (TB, D) bf16, c: (TB, K, D) bf16, o: (TB, K) f32
    tb, d = q_ref.shape
    k = c_ref.shape[1]
    acc = jnp.zeros((tb, k), jnp.float32)
    # Chunk the D reduction: bf16 multiplies on the VPU, f32 accumulation,
    # temporaries stay chunk-sized (no (TB,K,D) f32 materialization).
    for lo in range(0, d, d_chunk):
        hi = min(lo + d_chunk, d)
        qc = q_ref[:, lo:hi]                       # (TB, dc) bf16, static slice
        cc = c_ref[:, :, lo:hi]                    # (TB, K, dc) bf16
        prod = qc[:, None, :] * cc                 # bf16 VPU mul
        acc = acc + jnp.sum(prod.astype(jnp.float32), axis=-1)   # XLU reduce
    # TODO(synk): K (=topk) < 128 lanes -> masked vst on the tiny output;
    # lane-dense repack skipped (low value, see perf review).
    o_ref[...] = acc


def dot_score(query_emb, cand_emb, tile_b=None):
    """query_emb: [B, D], cand_emb: [B, K, D] (bf16) -> [B, K] f32."""
    b, d = query_emb.shape
    _, k, _ = cand_emb.shape
    itemsize = jnp.dtype(query_emb.dtype).itemsize
    tb = tile_b if tile_b is not None else _pick_tile(b, (k * d + d) * itemsize)

    return pl.pallas_call(
        _dot_sim_kernel,
        out_shape=jax.ShapeDtypeStruct((b, k), jnp.float32),
        grid_spec=pltpu.PrefetchScalarGridSpec(
            num_scalar_prefetch=0,
            grid=(pl.cdiv(b, tb),),
            in_specs=[
                pl.BlockSpec((tb, d), lambda i: (i, 0)),
                pl.BlockSpec((tb, k, d), lambda i: (i, 0, 0)),
            ],
            out_specs=pl.BlockSpec((tb, k), lambda i: (i, 0)),
        ),
        compiler_params=pltpu.CompilerParams(
            dimension_semantics=("parallel",),
            vmem_limit_bytes=32 * 1024 * 1024,   # inputs double-buffered fit w/ headroom
        ),
    )(query_emb, cand_emb)


# ---------------------------------------------------------------------------
# Synthetic encoder (deterministic params; glue in plain JAX + Pallas kernels)
# ---------------------------------------------------------------------------
class SyntheticEncoderParams:
    def __init__(self, key, vocab_size, hidden, embed_dim):
        k1, k2, k3 = jax.random.split(key, 3)
        self.embedding = jax.random.normal(k1, (vocab_size, hidden), jnp.float32) * 0.1
        # Weights carried bf16 into the MXU matmul; bias stays f32 (tiny).
        self.w = (jax.random.normal(k2, (hidden, embed_dim), jnp.float32) * 0.1
                  ).astype(jnp.bfloat16)
        self.b = jax.random.normal(k3, (1, embed_dim), jnp.float32) * 0.01


def encode_cls(params, input_ids, attention_mask, *, normalize):
    """Synthetic CLS embedding [N, embed_dim] (bf16) for ids [N, L]."""
    tok = params.embedding[input_ids]                         # (N, L, H)
    mask = attention_mask.astype(jnp.float32)[..., None]      # (N, L, 1)
    denom = jnp.maximum(jnp.sum(mask, axis=1), 1.0)           # (N, 1)
    pooled = jnp.sum(tok * mask, axis=1) / denom              # (N, H)
    return encoder_project(pooled.astype(jnp.bfloat16), params.w, params.b,
                           normalize=normalize)               # (N, D) via Pallas


# ---------------------------------------------------------------------------
# CLOnEL forward (JAX/Pallas version)
# ---------------------------------------------------------------------------
class CLOnELJax:
    def __init__(self, max_length, topk, train_similarity_func, encoder_params,
                 embed_dim=768):
        self.max_length = max_length
        self.topk = topk
        self.train_similarity_func = train_similarity_func
        self.encoder = encoder_params
        self.embed_dim = embed_dim

    @property
    def _normalize(self):
        return self.train_similarity_func == "cosine"

    def get_query_embedding(self, query_token):
        # squeeze(1) on each field, then encoder(...)[0][:, 0] -> CLS embedding
        ids = jnp.squeeze(query_token["input_ids"], axis=1)
        am = jnp.squeeze(query_token["attention_mask"], axis=1)
        return encode_cls(self.encoder, ids, am, normalize=self._normalize)   # (B, D)

    def get_candidate_embedding(self, candidate_tokens):
        ids = candidate_tokens["input_ids"].reshape(-1, self.max_length)
        am = candidate_tokens["attention_mask"].reshape(-1, self.max_length)
        cand = encode_cls(self.encoder, ids, am, normalize=self._normalize)    # (B*K, D)
        return cand.reshape(-1, self.topk, self.embed_dim)                     # (B, K, D)

    def forward(self, x):
        query_token, candidate_tokens = x
        if self.train_similarity_func not in ("cosine", "dot"):
            raise ValueError("train_similarity_func must be cosine or dot")
        q = self.get_query_embedding(query_token)
        c = self.get_candidate_embedding(candidate_tokens)
        # cosine: embeddings are already L2-normalized, so dot == cosine.
        return dot_score(q, c)                                                 # (B, K)


# ---------------------------------------------------------------------------
# Plain-JAX references for validation (same bf16 quantization points)
# ---------------------------------------------------------------------------
def _ref_encode(params, ids, am, normalize):
    tok = params.embedding[ids]
    mask = am.astype(jnp.float32)[..., None]
    denom = jnp.maximum(jnp.sum(mask, axis=1), 1.0)
    pooled = (jnp.sum(tok * mask, axis=1) / denom).astype(jnp.bfloat16)
    y = jnp.tanh(jnp.dot(pooled.astype(jnp.float32),
                         params.w.astype(jnp.float32)) + params.b)
    if normalize:
        eps = jnp.float32(1e-8)
        y = y * lax.rsqrt(jnp.maximum(jnp.sum(y * y, axis=-1, keepdims=True),
                                      eps * eps))
    return y.astype(jnp.bfloat16)


def _ref_dot(q, c):
    # bf16 products (same rounding as the kernel), f32 accumulation.
    return jnp.sum((q[:, None, :] * c).astype(jnp.float32), axis=-1)


if __name__ == "__main__":
    B, K, L, H, D, VOCAB = 2, 16, 8, 32, 768, 100

    key = jax.random.PRNGKey(0)
    k_enc, k_qid, k_cid = jax.random.split(key, 3)

    enc_params = SyntheticEncoderParams(k_enc, VOCAB, H, D)

    query_token = {
        "input_ids": jax.random.randint(k_qid, (B, 1, L), 0, VOCAB, jnp.int32),
        "attention_mask": jnp.ones((B, 1, L), jnp.int32),
    }
    candidate_tokens = {
        "input_ids": jax.random.randint(k_cid, (B, K, L), 0, VOCAB, jnp.int32),
        "attention_mask": jnp.ones((B, K, L), jnp.int32),
    }

    ok = True
    for func in ("cosine", "dot"):
        model = CLOnELJax(max_length=L, topk=K, train_similarity_func=func,
                          encoder_params=enc_params, embed_dim=D)
        score = jax.block_until_ready(model.forward((query_token, candidate_tokens)))
        assert score.shape == (B, K), score.shape

        # Check 1: projection kernel (incl. cosine's encode-time L2 norm).
        q_emb = model.get_query_embedding(query_token)
        c_emb = model.get_candidate_embedding(candidate_tokens)
        q_ref = _ref_encode(enc_params,
                            jnp.squeeze(query_token["input_ids"], 1),
                            jnp.squeeze(query_token["attention_mask"], 1),
                            normalize=(func == "cosine"))
        if not jnp.allclose(q_emb.astype(jnp.float32), q_ref.astype(jnp.float32),
                            atol=1e-2, rtol=1e-2):
            ok = False

        # Check 2: similarity kernel vs plain JAX on the same embeddings.
        ref = _ref_dot(q_emb, c_emb)
        if not jnp.allclose(score, ref, atol=1e-3, rtol=1e-3):
            ok = False

    if ok:
        print("KERNEL_OK")
    else:
        print("KERNEL_MISMATCH")
</pallas_src>

<mosaic_0001>
module attributes {stable_mosaic.version = 11 : i64} {
  func.func @_proj_kernel(%arg0: i32, %arg1: memref<2x32xbf16, #tpu.memory_space<vmem>>, %arg2: memref<32x768xbf16, #tpu.memory_space<vmem>>, %arg3: memref<1x768xf32, #tpu.memory_space<vmem>>, %arg4: memref<2x768xbf16, #tpu.memory_space<vmem>>) attributes {dimension_semantics = [#tpu.dimension_semantics<parallel>], iteration_bounds = array<i64: 1>, scalar_prefetch = 0 : i64, scratch_operands = 0 : i64, tpu.core_type = #tpu.core_type<tc>, window_params = [{transform_indices = @transform_0, window_bounds = array<i64: 2, 32>}, {pipeline_mode = #tpu.pipeline_mode<synchronous>, transform_indices = @transform_1, window_bounds = array<i64: 32, 768>}, {pipeline_mode = #tpu.pipeline_mode<synchronous>, transform_indices = @transform_2, window_bounds = array<i64: 1, 768>}, {transform_indices = @transform_3, window_bounds = array<i64: 2, 768>}]} {
    %c0 = arith.constant 0 : index
    %c0_0 = arith.constant 0 : index
    %0 = vector.load %arg1[%c0, %c0_0] : memref<2x32xbf16, #tpu.memory_space<vmem>>, vector<2x32xbf16>
    %c0_1 = arith.constant 0 : index
    %c0_2 = arith.constant 0 : index
    %1 = vector.load %arg2[%c0_1, %c0_2] : memref<32x768xbf16, #tpu.memory_space<vmem>>, vector<32x768xbf16>
    %cst = arith.constant dense<0.000000e+00> : vector<2x768xf32>
    %2 = tpu.matmul %0, %1, %cst {dimension_numbers = #tpu.dot_dimension_numbers<[1], [0], [0], [1], [0, 0, 1, 1], [], []>} : vector<2x32xbf16>, vector<32x768xbf16>, vector<2x768xf32> -> vector<2x768xf32>
    %c0_3 = arith.constant 0 : index
    %c0_4 = arith.constant 0 : index
    %3 = vector.load %arg3[%c0_3, %c0_4] : memref<1x768xf32, #tpu.memory_space<vmem>>, vector<1x768xf32>
    %4 = vector.broadcast %3 : vector<1x768xf32> to vector<2x768xf32>
    %5 = arith.addf %2, %4 : vector<2x768xf32>
    %6 = math.tanh %5 : vector<2x768xf32>
    %7 = arith.mulf %6, %6 : vector<2x768xf32>
    %cst_5 = arith.constant dense<0.000000e+00> : vector<2xf32>
    %8 = vector.multi_reduction <add>, %7, %cst_5 [1] : vector<2x768xf32> to vector<2xf32>
    %9 = vector.shape_cast %8 : vector<2xf32> to vector<2x1xf32>
    %cst_6 = arith.constant 9.99999993E-9 : f32
    %cst_7 = arith.constant 9.99999993E-9 : f32
    %10 = arith.mulf %cst_6, %cst_7 : f32
    %11 = vector.broadcast %10 : f32 to vector<2x1xf32>
    %12 = arith.maximumf %9, %11 : vector<2x1xf32>
    %13 = math.rsqrt %12 : vector<2x1xf32>
    %14 = vector.broadcast %13 : vector<2x1xf32> to vector<2x768xf32>
    %15 = arith.mulf %6, %14 : vector<2x768xf32>
    %16 = arith.truncf %15 : vector<2x768xf32> to vector<2x768xbf16>
    %c0_8 = arith.constant 0 : index
    %c0_9 = arith.constant 0 : index
    %17 = vector.load %arg4[%c0_8, %c0_9] : memref<2x768xbf16, #tpu.memory_space<vmem>>, vector<2x768xbf16>
    tpu.vector_store %arg4[%c0_8, %c0_9], %16 {strides = array<i32>} : memref<2x768xbf16, #tpu.memory_space<vmem>>, vector<2x768xbf16>,
    return
  }
  func.func @transform_0(%arg0: i32) -> (i32, i32) {
    %c0_i32 = arith.constant 0 : i32
    %c0_i32_0 = arith.constant 0 : i32
    return %arg0, %c0_i32 : i32, i32
  }
  func.func @transform_1(%arg0: i32) -> (i32, i32) {
    %c0_i32 = arith.constant 0 : i32
    %c0_i32_0 = arith.constant 0 : i32
    %c0_i32_1 = arith.constant 0 : i32
    return %c0_i32, %c0_i32_0 : i32, i32
  }
  func.func @transform_2(%arg0: i32) -> (i32, i32) {
    %c0_i32 = arith.constant 0 : i32
    %c0_i32_0 = arith.constant 0 : i32
    %c0_i32_1 = arith.constant 0 : i32
    return %c0_i32, %c0_i32_0 : i32, i32
  }
  func.func @transform_3(%arg0: i32) -> (i32, i32) {
    %c0_i32 = arith.constant 0 : i32
    %c0_i32_0 = arith.constant 0 : i32
    return %arg0, %c0_i32 : i32, i32
  }
}

</mosaic_0001>

<llo_original>
// kernel: tpu_custom_call.1
$region0: #{tpu_custom_call.1}
  #allocation0 [shape = 'u32[]', space=smem, size = 0x4, offset = 0x4, fixed_abs, tag = 'smem constant byte address 0x4 - core index']
  #allocation1 [shape = 'u32[144,128]{1,0:T(1,128)}', space=vmem, size = 0x12000, scoped, tag = 'internal scratch']
  %s0 = inlined_call_operand.hbm [shape: bf16[2,32], index: 0, kind: input, shape index: {}]
  %s1 = inlined_call_operand.hbm [shape: bf16[32,768], index: 1, kind: input, shape index: {}]
  %s2 = inlined_call_operand.vmem [shape: f32[1,768], index: 2, kind: input, shape index: {}]
  %s3 = inlined_call_operand.hbm [shape: bf16[2,768], index: 3, kind: output, shape index: {}]
  %s4 = sld [smem:[#allocation0]]
  $region30: #{tpu_custom_call.1} parent=0
    _
  %s6 = ssub.s32 1, %s4
  %s7 = scalar_select 0, %s6, %s4
  $region1: #{tpu_custom_call.1} parent=0
    #allocation2 [shape = 'u8[512]{0}', space=vmem, size = 0x400, scoped, tag = 'input window, operand 0, single buffered']
    #allocation3 [shape = 's32[1]{0}', space=sflag, size = 0x4, scoped, tag = 'scoped memory for tpu_custom_call.1']
    #allocation4 [shape = 's32[1]{0}', space=sflag, size = 0x4, scoped, tag = 'scoped memory for tpu_custom_call.1']
    #allocation5 [shape = 'u8[49152]{0}', space=vmem, size = 0xc000, scoped, tag = 'input window, operand 1, single buffered']
    #allocation6 [shape = 's32[1]{0}', space=sflag, size = 0x4, scoped, tag = 'scoped memory for tpu_custom_call.1']
    #allocation7 [shape = 'u8[3072]{0}', space=vmem, size = 0xc00, scoped, tag = 'output window, operand 0, single buffered']
    %8 = vsyncpa [#allocation3], 0
    %9 = vsyncpa [#allocation6], 0
    %10 = vsyncpa [#allocation4], 0
    // Predicated region
    $region2: #{tpu_custom_call.1} parent=1 // pred_check
      _
    $region3: #{tpu_custom_call.1} parent=1 // pred_check_branch
      %12 = sbr.rel (0) target = $region5
    $region4: #{tpu_custom_call.1} parent=1 // pred_region
      %s14 = ssub.s32 16, 16
      %15 = vsyncadd [#allocation3], %s14
      %s17 = sshll.u32 [#allocation2], 4
      %s18 = int_to_ptr.vmem [resolvable:$true] %s17
      %20 = dma.hbm_to_vmem [thread:$0]  %s0, 16, %s18, [#allocation3]
    $region5: #{tpu_custom_call.1} parent=1 // pred_fallthru
      _
    // Predicated region
    $region6: #{tpu_custom_call.1} parent=1 // pred_check
      _
    $region7: #{tpu_custom_call.1} parent=1 // pred_check_branch
      %22 = sbr.rel (0) target = $region9
    $region8: #{tpu_custom_call.1} parent=1 // pred_region
      %s24 = ssub.s32 1536, 1536
      %25 = vsyncadd [#allocation6], %s24
      %s26 = sshll.u32 [#allocation5], 4
      %s27 = int_to_ptr.vmem [resolvable:$true] %s26
      %32 = dma.hbm_to_vmem [thread:$0]  %s1, 1536, %s27, [#allocation6], 384, 384, 24
    $region9: #{tpu_custom_call.1} parent=1 // pred_fallthru
      _
    // Predicated region
    $region10: #{tpu_custom_call.1} parent=1 // pred_check
      _
    $region11: #{tpu_custom_call.1} parent=1 // pred_check_branch
      %34 = sbr.rel (0) target = $region13
    $region12: #{tpu_custom_call.1} parent=1 // pred_region
      _
    $region13: #{tpu_custom_call.1} parent=1 // pred_fallthru
      _
    // Predicated region
    $region14: #{tpu_custom_call.1} parent=1 // pred_check
      _
    $region15: #{tpu_custom_call.1} parent=1 // pred_check_branch
      %36 = sbr.rel (0) target = $region17
    $region16: #{tpu_custom_call.1} parent=1 // pred_region
      %37 = dma.done [#allocation3], 16
    $region17: #{tpu_custom_call.1} parent=1 // pred_fallthru
      _
    // Predicated region
    $region18: #{tpu_custom_call.1} parent=1 // pred_check
      _
    $region19: #{tpu_custom_call.1} parent=1 // pred_check_branch
      %39 = sbr.rel (0) target = $region21
    $region20: #{tpu_custom_call.1} parent=1 // pred_region
      %40 = dma.done [#allocation6], 1536
    $region21: #{tpu_custom_call.1} parent=1 // pred_fallthru
      _
    %v42 = vld [vmem:[#allocation2] sm:$0x1]
    %v43 = vld [vmem:[#allocation5] sm:$0xff]
    %v44 = vld [vmem:[#allocation5 + $0x8] sm:$0xff]
    %v45 = vld [vmem:[#allocation5 + $0x10] sm:$0xff]
    %v46 = vld [vmem:[#allocation5 + $0x18] sm:$0xff]
    %v47 = vld [vmem:[#allocation5 + $0x20] sm:$0xff]
    %v48 = vld [vmem:[#allocation5 + $0x28] sm:$0xff]
    %v49 = vld [vmem:[#allocation5 + $0x30] sm:$0xff]
    %v50 = vld [vmem:[#allocation5 + $0x38] sm:$0xff]
    %v51 = vld [vmem:[#allocation5 + $0x40] sm:$0xff]
    %v52 = vld [vmem:[#allocation5 + $0x48] sm:$0xff]
    %v53 = vld [vmem:[#allocation5 + $0x50] sm:$0xff]
    %v54 = vld [vmem:[#allocation5 + $0x58] sm:$0xff]
    %v55 = vld [vmem:[%s2] sm:$0x3f]
    %v57 = vlaneseq
    %v58 = vshrl.u32 %v57, 7
    %v59 = vsub.s32 0, %v58
    %v60 = vrot.slane %v55, %v59
    %v61 = vlaneseq
    %v62 = vshrl.u32 %v61, 7
    %v63 = vsub.s32 1, %v62
    %v64 = vrot.slane %v55, %v63
    %v65 = vlaneseq
    %v66 = vshrl.u32 %v65, 7
    %v67 = vsub.s32 2, %v66
    %v68 = vrot.slane %v55, %v67
    %v69 = vlaneseq
    %v70 = vshrl.u32 %v69, 7
    %v71 = vsub.s32 3, %v70
    %v72 = vrot.slane %v55, %v71
    %v73 = vlaneseq
    %v74 = vshrl.u32 %v73, 7
    %v75 = vsub.s32 4, %v74
    %v76 = vrot.slane %v55, %v75
    %v77 = vlaneseq
    %v78 = vshrl.u32 %v77, 7
    %v79 = vsub.s32 5, %v78
    %v80 = vrot.slane %v55, %v79
    %v99 = vunpack.c.l.b16 %v43
    %v100 = vunpack.c.h.b16 %v43
    %v101 = vunpack.c.l.b16 %v44
    %v102 = vunpack.c.h.b16 %v44
    %v103 = vunpack.c.l.b16 %v45
    %v104 = vunpack.c.h.b16 %v45
    %v105 = vunpack.c.l.b16 %v46
    %v106 = vunpack.c.h.b16 %v46
    %v107 = vunpack.c.l.b16 %v47
    %v108 = vunpack.c.h.b16 %v47
    %v109 = vunpack.c.l.b16 %v48
    %v110 = vunpack.c.h.b16 %v48
    %v111 = vunpack.c.l.b16 %v49
    %v112 = vunpack.c.h.b16 %v49
    %v113 = vunpack.c.l.b16 %v50
    %v114 = vunpack.c.h.b16 %v50
    %v115 = vunpack.c.l.b16 %v51
    %v116 = vunpack.c.h.b16 %v51
    %v117 = vunpack.c.l.b16 %v52
    %v118 = vunpack.c.h.b16 %v52
    %v119 = vunpack.c.l.b16 %v53
    %v120 = vunpack.c.h.b16 %v53
    %v121 = vunpack.c.l.b16 %v54
    %v122 = vunpack.c.h.b16 %v54
    %v123 = vpack.c.b16 %v105, %v99
    %v124 = vpack.c.b16 %v106, %v100
    %v125 = vpack.c.b16 %v107, %v101
    %v126 = vpack.c.b16 %v108, %v102
    %v127 = vpack.c.b16 %v109, %v103
    %v128 = vpack.c.b16 %v110, %v104
    %v129 = vpack.c.b16 %v117, %v111
    %v130 = vpack.c.b16 %v118, %v112
    %v131 = vpack.c.b16 %v119, %v113
    %v132 = vpack.c.b16 %v120, %v114
    %v133 = vpack.c.b16 %v121, %v115
    %v134 = vpack.c.b16 %v122, %v116
    %vm147 = vcmask 261120
    %v149 = vsel %vm147, %v42, 0
    %151 = vmatprep.subr.bf16.mxu0 %v124
    %152 = vmatpush1.bf16.msra.mxu0 %v123
    %153 = vmatprep.subr.bf16.mxu0 %v130
    %154 = vmatpush1.bf16.msra.mxu0 %v129
    %155 = vmatprep.subr.bf16.mxu0 0
    %156 = vmatpush1.bf16.msra.mxu0 0
    %157 = vmatprep.subr.bf16.mxu0 0
    %158 = vmatpush1.bf16.msra.mxu0 0
    %159 = vmatprep.subr.bf16.mxu0 0
    %160 = vmatpush1.bf16.msra.mxu0 0
    %161 = vmatprep.subr.bf16.mxu0 0
    %162 = vmatpush1.bf16.msra.mxu0 0
    %163 = vmatprep.subr.bf16.mxu0 0
    %164 = vmatpush1.bf16.msra.mxu0 0
    %165 = vmatprep.subr.bf16.mxu0 0
    %166 = vmatpush1.bf16.msra.mxu0 0
    %167 = vmatprep.subr.bf16.mxu0 0
    %168 = vmatpush1.bf16.msra.mxu0 0
    %169 = vmatprep.subr.bf16.mxu0 0
    %170 = vmatpush1.bf16.msra.mxu0 0
    %171 = vmatprep.subr.bf16.mxu0 0
    %172 = vmatpush1.bf16.msra.mxu0 0
    %173 = vmatprep.subr.bf16.mxu0 0
    %174 = vmatpush1.bf16.msra.mxu0 0
    %175 = vmatprep.subr.bf16.mxu0 0
    %176 = vmatpush1.bf16.msra.mxu0 0
    %177 = vmatprep.subr.bf16.mxu0 0
    %178 = vmatpush1.bf16.msra.mxu0 0
    %179 = vmatprep.subr.bf16.mxu0 0
    %180 = vmatpush1.bf16.msra.mxu0 0
    %181 = vmatprep.subr.bf16.mxu0 0
    %182 = vmatpush1.bf16.msra.mxu0 0
    %183 = vmatprep.mubr.bf16.mxu0 0
    %184 = vmatmul.mubr.bf16.gmra.mrb[0].mxu0 %v149
    %v185 = vpop.f32.mrb[0].mxu0
    %v186 = vadd.f32 %v60, %v185
    %v187 = vpop.f32.mrb[0].mxu0
    %v188 = vadd.f32 %v64, %v187
    %v189 = vpop.f32.mrb[0].mxu0
    %v190 = vpop.f32.mrb[0].mxu0
    %191 = vdwg.mxu0
    %192 = vmatprep.subr.bf16.mxu0 %v126
    %193 = vmatpush1.bf16.msra.mxu0 %v125
    %194 = vmatprep.subr.bf16.mxu0 %v132
    %195 = vmatpush1.bf16.msra.mxu0 %v131
    %196 = vmatprep.subr.bf16.mxu0 0
    %197 = vmatpush1.bf16.msra.mxu0 0
    %198 = vmatprep.subr.bf16.mxu0 0
    %199 = vmatpush1.bf16.msra.mxu0 0
    %200 = vmatprep.subr.bf16.mxu0 0
    %201 = vmatpush1.bf16.msra.mxu0 0
    %202 = vmatprep.subr.bf16.mxu0 0
    %203 = vmatpush1.bf16.msra.mxu0 0
    %204 = vmatprep.subr.bf16.mxu0 0
    %205 = vmatpush1.bf16.msra.mxu0 0
    %206 = vmatprep.subr.bf16.mxu0 0
    %207 = vmatpush1.bf16.msra.mxu0 0
    %208 = vmatprep.subr.bf16.mxu0 0
    %209 = vmatpush1.bf16.msra.mxu0 0
    %210 = vmatprep.subr.bf16.mxu0 0
    %211 = vmatpush1.bf16.msra.mxu0 0
    %212 = vmatprep.subr.bf16.mxu0 0
    %213 = vmatpush1.bf16.msra.mxu0 0
    %214 = vmatprep.subr.bf16.mxu0 0
    %215 = vmatpush1.bf16.msra.mxu0 0
    %216 = vmatprep.subr.bf16.mxu0 0
    %217 = vmatpush1.bf16.msra.mxu0 0
    %218 = vmatprep.subr.bf16.mxu0 0
    %219 = vmatpush1.bf16.msra.mxu0 0
    %220 = vmatprep.subr.bf16.mxu0 0
    %221 = vmatpush1.bf16.msra.mxu0 0
    %222 = vmatprep.subr.bf16.mxu0 0
    %223 = vmatpush1.bf16.msra.mxu0 0
    %224 = vmatprep.mubr.bf16.mxu0 0
    %225 = vmatmul.mubr.bf16.gmra.mrb[0].mxu0 %v149
    %v226 = vpop.f32.mrb[0].mxu0
    %v227 = vadd.f32 %v68, %v226
    %v228 = vpop.f32.mrb[0].mxu0
    %v229 = vadd.f32 %v72, %v228
    %v230 = vpop.f32.mrb[0].mxu0
    %v231 = vpop.f32.mrb[0].mxu0
    %232 = vdwg.mxu0
    %233 = vmatprep.subr.bf16.mxu0 %v128
    %234 = vmatpush1.bf16.msra.mxu0 %v127
    %235 = vmatprep.subr.bf16.mxu0 %v134
    %236 = vmatpush1.bf16.msra.mxu0 %v133
    %237 = vmatprep.subr.bf16.mxu0 0
    %238 = vmatpush1.bf16.msra.mxu0 0
    %239 = vmatprep.subr.bf16.mxu0 0
    %240 = vmatpush1.bf16.msra.mxu0 0
    %241 = vmatprep.subr.bf16.mxu0 0
    %242 = vmatpush1.bf16.msra.mxu0 0
    %243 = vmatprep.subr.bf16.mxu0 0
    %244 = vmatpush1.bf16.msra.mxu0 0
    %245 = vmatprep.subr.bf16.mxu0 0
    %246 = vmatpush1.bf16.msra.mxu0 0
    %247 = vmatprep.subr.bf16.mxu0 0
    %248 = vmatpush1.bf16.msra.mxu0 0
    %249 = vmatprep.subr.bf16.mxu0 0
    %250 = vmatpush1.bf16.msra.mxu0 0
    %251 = vmatprep.subr.bf16.mxu0 0
    %252 = vmatpush1.bf16.msra.mxu0 0
    %253 = vmatprep.subr.bf16.mxu0 0
    %254 = vmatpush1.bf16.msra.mxu0 0
    %255 = vmatprep.subr.bf16.mxu0 0
    %256 = vmatpush1.bf16.msra.mxu0 0
    %257 = vmatprep.subr.bf16.mxu0 0
    %258 = vmatpush1.bf16.msra.mxu0 0
    %259 = vmatprep.subr.bf16.mxu0 0
    %260 = vmatpush1.bf16.msra.mxu0 0
    %261 = vmatprep.subr.bf16.mxu0 0
    %262 = vmatpush1.bf16.msra.mxu0 0
    %263 = vmatprep.subr.bf16.mxu0 0
    %264 = vmatpush1.bf16.msra.mxu0 0
    %265 = vmatprep.mubr.bf16.mxu0 0
    %266 = vmatmul.mubr.bf16.gmra.mrb[0].mxu0 %v149
    %v267 = vpop.f32.mrb[0].mxu0
    %v268 = vadd.f32 %v76, %v267
    %v269 = vpop.f32.mrb[0].mxu0
    %v270 = vadd.f32 %v80, %v269
    %v271 = vpop.f32.mrb[0].mxu0
    %v272 = vpop.f32.mrb[0].mxu0
    %273 = vdwg.mxu0
    %v274 = vtanh.pop %v186
    %v275 = vtanh.pop %v188
    %v276 = vtanh.pop %v227
    %v277 = vtanh.pop %v229
    %v278 = vtanh.pop %v268
    %v279 = vtanh.pop %v270
    %v280 = vmul.f32 %v274, %v274
    %v281 = vmul.f32 %v275, %v275
    %v282 = vmul.f32 %v276, %v276
    %v283 = vmul.f32 %v277, %v277
    %v284 = vmul.f32 %v278, %v278
    %v285 = vmul.f32 %v279, %v279
    %vm286 = vcmask 1041408
    %v287 = vsel %vm286, %v280, 0.0
    %v288 = vsel %vm286, %v281, 0.0
    %v289 = vadd.f32 %v287, %v288
    %v290 = vsel %vm286, %v282, 0.0
    %v291 = vadd.f32 %v289, %v290
    %v292 = vsel %vm286, %v283, 0.0
    %v293 = vadd.f32 %v291, %v292
    %v294 = vsel %vm286, %v284, 0.0
    %v295 = vadd.f32 %v293, %v294
    %v296 = vsel %vm286, %v285, 0.0
    %v297 = vadd.f32 %v295, %v296
    %298 = vadd.xlane.f32.xlu0 %v297
    %v299 = vpop.xlane.xlu0 %298
    %v300 = vmax.f32 %v299, 1e-16
    %v301 = vrsqrt.pop %v300
    %v302 = vmul.f32 %v274, %v301
    %v303 = vmul.f32 %v275, %v301
    %v304 = vmul.f32 %v276, %v301
    %v305 = vmul.f32 %v277, %v301
    %v306 = vmul.f32 %v278, %v301
    %v307 = vmul.f32 %v279, %v301
    %v308 = vpack.c.bf16 %v302, %v302
    %v309 = vpack.c.bf16 %v303, %v303
    %v310 = vpack.c.bf16 %v304, %v304
    %v311 = vpack.c.bf16 %v305, %v305
    %v312 = vpack.c.bf16 %v306, %v306
    %v313 = vpack.c.bf16 %v307, %v307
    %v320 = vcombine.low %v308, %v309
    %v321 = vcombine.low %v310, %v311
    %v322 = vcombine.low %v312, %v313
    %v324 = vunpack.c.l.s4 1966171168
    %v325 = vunpack.c.0.s8 %v324
    %v326 = vlaneseq
    %v327 = vshrl.u32 %v326, 7
    %v328 = vsub.s32 %v325, %v327
    %v329 = vrot.slane %v320, %v328
    %v331 = vunpack.c.l.s4 1966171168
    %v332 = vunpack.c.0.s8 %v331
    %v333 = vlaneseq
    %v334 = vshrl.u32 %v333, 7
    %v335 = vsub.s32 %v332, %v334
    %v336 = vrot.slane %v321, %v335
    %v338 = vunpack.c.l.s4 1966171168
    %v339 = vunpack.c.0.s8 %v338
    %v340 = vlaneseq
    %v341 = vshrl.u32 %v340, 7
    %v342 = vsub.s32 %v339, %v341
    %v343 = vrot.slane %v322, %v342
    %v344 = vcombine.low %v329, %v336
    %v346 = vunpack.c.l.s4 1966171168
    %v347 = vunpack.c.0.s8 %v346
    %v348 = vlaneseq
    %v349 = vshrl.u32 %v348, 7
    %v350 = vsub.s32 %v347, %v349
    %v351 = vrot.slane %v344, %v350
    %v353 = vunpack.c.l.s4 1966171168
    %v354 = vunpack.c.0.s8 %v353
    %v355 = vlaneseq
    %v356 = vshrl.u32 %v355, 7
    %v357 = vsub.s32 %v354, %v356
    %v358 = vrot.slane %v343, %v357
    %v359 = vcombine.low %v351, %v358
    %361 = vst [vmem:[#allocation7] sm:$0x3f] %v359
    // Predicated region
    $region22: #{tpu_custom_call.1} parent=1 // pred_check
      _
    $region23: #{tpu_custom_call.1} parent=1 // pred_check_branch
      %363 = sbr.rel (0) target = $region25
    $region24: #{tpu_custom_call.1} parent=1 // pred_region
      %s365 = ssub.s32 96, 96
      %366 = vsyncadd [#allocation4], %s365
      %s368 = sshll.u32 [#allocation7], 4
      %s369 = int_to_ptr.vmem [resolvable:$true] %s368
      %371 = dma.vmem_to_hbm [thread:$0]  %s369, 96, %s3, [#allocation4]
    $region25: #{tpu_custom_call.1} parent=1 // pred_fallthru
      _
    // Predicated region
    $region26: #{tpu_custom_call.1} parent=1 // pred_check
      _
    $region27: #{tpu_custom_call.1} parent=1 // pred_check_branch
      %373 = sbr.rel (0) target = $region29
    $region28: #{tpu_custom_call.1} parent=1 // pred_region
      %374 = dma.done [#allocation4], 96
    $region29: #{tpu_custom_call.1} parent=1 // pred_fallthru
      _
    %375 = vsyncpa [#allocation3], 1
    %376 = vsyncpa [#allocation6], 1
    %377 = vsyncpa [#allocation4], 1

</llo_original>
